<compile_context>
chip_gen: v7x
topology: tpu7x:2x2x1
jax: 0.10.0
libtpu: 0.0.40
codegen_flags: <defaults>
</compile_context>

<pallas_src>
import functools

import numpy as np

import jax
import jax.numpy as jnp
from jax import lax
from jax.experimental import pallas as pl
from jax.experimental.pallas import tpu as pltpu


def _stack_taps(x2d, mask_ref, *, K, W, HW, pad, dil):
    """Build the (K*K*C, HW) stacked/shifted/masked conv operand.

    stacked[tap*C + c, n] = x2d[c, n + s_tap] if the tap stays inside the
    image at destination n else 0, with s_tap = dy*W + dx.  The circular
    pltpu.roll is exact here because the precomputed mask zeroes exactly the
    wrapped / out-of-image lanes.
    """
    parts = []
    for ky in range(K):
        for kx in range(K):
            s = (ky * dil - pad) * W + (kx * dil - pad)
            rolled = x2d if s == 0 else pltpu.roll(x2d, (-s) % HW, 1)
            parts.append(rolled * mask_ref[ky * K + kx])     # mask: (1, HW)
    return jnp.concatenate(parts, axis=0)


def xgates_kernel(x_ref, wxf_ref, b_ref, mask_ref, gx_ref,
                  *, K, W, HW, pad, dil):
    """Parallel pass: gates_x[b, t] = Wx (*) x[b, t] + bias (one MXU matmul)."""
    x = x_ref[0, 0]                                          # (C_in, HW) f32
    stacked = _stack_taps(x, mask_ref, K=K, W=W, HW=HW, pad=pad, dil=dil)
    gx = jnp.dot(wxf_ref[...], stacked.astype(jnp.bfloat16),
                 preferred_element_type=jnp.float32)         # (4*C_out, HW)
    gx_ref[0, 0] = gx + b_ref[...]


def lstm_kernel(gx_ref, whf_ref, mask_ref, wci_ref, wcf_ref, wco_ref,
                h0_ref, c0_ref, hs_ref, h_ref, c_ref,
                *, C_out, K, W, HW, pad, dil):
    """Serial pass over T (parallel over B): h-conv + pointwise LSTM update."""
    t = pl.program_id(1)

    # Load the provided initial state at the start of each batch's sequence.
    @pl.when(t == 0)
    def _():
        h_ref[...] = h0_ref[...]
        c_ref[...] = c0_ref[...]

    h = h_ref[0]                                             # (C_out, HW)
    c = c_ref[0]                                             # (C_out, HW)

    stacked_h = _stack_taps(h, mask_ref, K=K, W=W, HW=HW, pad=pad, dil=dil)
    gates = gx_ref[0, 0] + jnp.dot(
        whf_ref[...], stacked_h.astype(jnp.bfloat16),
        preferred_element_type=jnp.float32)                  # (4*C_out, HW)

    ig = gates[0 * C_out:1 * C_out]
    fg = gates[1 * C_out:2 * C_out]
    gg = gates[2 * C_out:3 * C_out]
    og = gates[3 * C_out:4 * C_out]

    i = jax.nn.sigmoid(ig + wci_ref[...] * c)
    f = jax.nn.sigmoid(fg + wcf_ref[...] * c)
    c_new = f * c + i * jnp.tanh(gg)
    o = jax.nn.sigmoid(og + wco_ref[...] * c_new)
    h_new = o * jnp.tanh(c_new)

    h_ref[0] = h_new
    c_ref[0] = c_new
    hs_ref[0, 0] = h_new


def convlstm_block(inputs, w, b, wci, wcf, wco, lstm_state=None,
                   *, kernel=3, stride=1, padding=1, dilation=1, groups=1):
    """Pallas implementation of ConvLSTMBlock.forward.

    inputs: (B, T, C_in, H, W) f32
    w:      (4*C_out, C_in + C_out, K, K) conv weight, b: (4*C_out,)
    wci/wcf/wco: (1, C_out, H, W) peephole weights.
    Returns (next_hs (B, T, C_out, H, W), (h, c) each (B, C_out, H, W)).
    """
    # TODO(synk): stride != 1 / groups != 1 not implemented (the module's
    # recurrence requires the conv output to keep image_size anyway).
    assert stride == 1 and groups == 1
    B, T, C_in, H, W = inputs.shape
    C4 = w.shape[0]
    C_out = C4 // 4
    K = kernel
    HW = H * W

    # --- glue: pure reshapes (no transposes of the big tensors) ---
    x = inputs.astype(jnp.float32).reshape(B, T, C_in, HW)

    # Fused tap-major weights: column index = tap*C + c  (tap = ky*K + kx).
    wx = w[:, :C_in]                                   # (4C, C_in, K, K)
    wh = w[:, C_in:]                                   # (4C, C_out, K, K)
    wxf = jnp.transpose(wx, (0, 2, 3, 1)).reshape(C4, K * K * C_in)
    whf = jnp.transpose(wh, (0, 2, 3, 1)).reshape(C4, K * K * C_out)
    wxf = wxf.astype(jnp.bfloat16)
    whf = whf.astype(jnp.bfloat16)
    b_k = b.reshape(C4, 1).astype(jnp.float32)

    # Per-tap validity masks, computed once on the host (no per-step iotas).
    ys, xs = np.meshgrid(np.arange(H), np.arange(W), indexing="ij")
    ys = ys.reshape(-1)
    xs = xs.reshape(-1)
    mask_list = []
    for ky in range(K):
        for kx in range(K):
            dy = ky * dilation - padding
            dx = kx * dilation - padding
            valid = ((ys + dy >= 0) & (ys + dy < H) &
                     (xs + dx >= 0) & (xs + dx < W))
            mask_list.append(valid.astype(np.float32))
    masks = jnp.asarray(np.stack(mask_list).reshape(K * K, 1, HW))

    def peep(p):  # (1, C_out, H, W) -> (C_out, HW), no batch replication
        return p.reshape(C_out, HW).astype(jnp.float32)

    if lstm_state is None:
        h0 = jnp.zeros((B, C_out, HW), jnp.float32)
        c0 = jnp.zeros((B, C_out, HW), jnp.float32)
    else:
        h_in, c_in = lstm_state
        h0 = h_in.astype(jnp.float32).reshape(B, C_out, HW)
        c0 = c_in.astype(jnp.float32).reshape(B, C_out, HW)

    cparams_par = pltpu.CompilerParams(
        dimension_semantics=("parallel", "parallel"),
        vmem_limit_bytes=32 * 1024 * 1024)
    cparams_seq = pltpu.CompilerParams(
        dimension_semantics=("parallel", "arbitrary"),
        vmem_limit_bytes=32 * 1024 * 1024)

    # --- pass 1: input conv (with bias) hoisted off the recurrence ---------
    gx = pl.pallas_call(
        functools.partial(xgates_kernel, K=K, W=W, HW=HW,
                          pad=padding, dil=dilation),
        out_shape=jax.ShapeDtypeStruct((B, T, C4, HW), jnp.float32),
        grid_spec=pltpu.PrefetchScalarGridSpec(
            num_scalar_prefetch=0,
            grid=(B, T),
            in_specs=[
                pl.BlockSpec((1, 1, C_in, HW), lambda bb, tt: (bb, tt, 0, 0)),
                pl.BlockSpec((C4, K * K * C_in), lambda bb, tt: (0, 0)),
                pl.BlockSpec((C4, 1), lambda bb, tt: (0, 0)),
                pl.BlockSpec((K * K, 1, HW), lambda bb, tt: (0, 0, 0)),
            ],
            out_specs=pl.BlockSpec((1, 1, C4, HW),
                                   lambda bb, tt: (bb, tt, 0, 0)),
        ),
        compiler_params=cparams_par,
    )(x, wxf, b_k, masks)

    # --- pass 2: sequential recurrence over T, parallel over B -------------
    state_spec = pl.BlockSpec((1, C_out, HW), lambda bb, tt: (bb, 0, 0))
    hs, h, c = pl.pallas_call(
        functools.partial(lstm_kernel, C_out=C_out, K=K, W=W, HW=HW,
                          pad=padding, dil=dilation),
        out_shape=(jax.ShapeDtypeStruct((B, T, C_out, HW), jnp.float32),
                   jax.ShapeDtypeStruct((B, C_out, HW), jnp.float32),
                   jax.ShapeDtypeStruct((B, C_out, HW), jnp.float32)),
        grid_spec=pltpu.PrefetchScalarGridSpec(
            num_scalar_prefetch=0,
            grid=(B, T),
            in_specs=[
                pl.BlockSpec((1, 1, C4, HW), lambda bb, tt: (bb, tt, 0, 0)),
                pl.BlockSpec((C4, K * K * C_out), lambda bb, tt: (0, 0)),
                pl.BlockSpec((K * K, 1, HW), lambda bb, tt: (0, 0, 0)),
                pl.BlockSpec((C_out, HW), lambda bb, tt: (0, 0)),   # Wci
                pl.BlockSpec((C_out, HW), lambda bb, tt: (0, 0)),   # Wcf
                pl.BlockSpec((C_out, HW), lambda bb, tt: (0, 0)),   # Wco
                state_spec,   # h0
                state_spec,   # c0
            ],
            out_specs=[
                pl.BlockSpec((1, 1, C_out, HW),
                             lambda bb, tt: (bb, tt, 0, 0)),        # hs
                state_spec,   # h (revisited over t -> carries the recurrence)
                state_spec,   # c
            ],
        ),
        compiler_params=cparams_seq,
    )(gx, whf, masks, peep(wci), peep(wcf), peep(wco), h0, c0)

    next_hs = hs.reshape(B, T, C_out, H, W)
    h_out = h.reshape(B, C_out, H, W)
    c_out = c.reshape(B, C_out, H, W)
    return next_hs, (h_out, c_out)


def ref_convlstm(inputs, w, b, wci, wcf, wco, padding=1, dilation=1):
    """Pure-JAX reference mirroring the PyTorch module."""
    B, T, C_in, H, W = inputs.shape
    C_out = w.shape[0] // 4
    h = jnp.zeros((B, C_out, H, W), jnp.float32)
    c = jnp.zeros((B, C_out, H, W), jnp.float32)
    hs = []
    for t in range(T):
        xcat = jnp.concatenate([inputs[:, t], h], axis=1)
        gates = lax.conv_general_dilated(
            xcat, w, window_strides=(1, 1),
            padding=((padding, padding), (padding, padding)),
            rhs_dilation=(dilation, dilation),
            dimension_numbers=("NCHW", "OIHW", "NCHW"),
        ) + b[None, :, None, None]
        ig, fg, gg, og = jnp.split(gates, 4, axis=1)
        i = jax.nn.sigmoid(ig + wci * c)
        f = jax.nn.sigmoid(fg + wcf * c)
        c = f * c + i * jnp.tanh(gg)
        o = jax.nn.sigmoid(og + wco * c)
        h = o * jnp.tanh(c)
        hs.append(h)
    return jnp.stack(hs, axis=1), (h, c)


if __name__ == "__main__":
    B, T, C_in, C_out, H, K = 2, 4, 4, 8, 16, 3
    key = jax.random.PRNGKey(0)
    ks = jax.random.split(key, 6)
    inputs = jax.random.normal(ks[0], (B, T, C_in, H, H), jnp.float32)
    w = 0.1 * jax.random.normal(ks[1], (4 * C_out, C_in + C_out, K, K),
                                jnp.float32)
    b = 0.1 * jax.random.normal(ks[2], (4 * C_out,), jnp.float32)
    # Note: the module initializes Wci/Wcf/Wco to zeros; we use deterministic
    # random values so the peephole path is actually exercised.
    wci = 0.1 * jax.random.normal(ks[3], (1, C_out, H, H), jnp.float32)
    wcf = 0.1 * jax.random.normal(ks[4], (1, C_out, H, H), jnp.float32)
    wco = 0.1 * jax.random.normal(ks[5], (1, C_out, H, H), jnp.float32)

    out = convlstm_block(inputs, w, b, wci, wcf, wco)
    out = jax.block_until_ready(out)
    hs, (h_fin, c_fin) = out

    hs_r, (h_r, c_r) = ref_convlstm(inputs, w, b, wci, wcf, wco)
    assert hs.shape == (B, T, C_out, H, H)
    err = max(float(jnp.max(jnp.abs(hs - hs_r))),
              float(jnp.max(jnp.abs(h_fin - h_r))),
              float(jnp.max(jnp.abs(c_fin - c_r))))
    # MXU operands are bf16 (f32 accumulation / pointwise math), so the
    # tolerance is loosened relative to a pure-f32 kernel.
    assert err < 3e-2, f"max abs error vs reference: {err}"
    print("KERNEL_OK")
</pallas_src>

<mosaic_0001>
module attributes {stable_mosaic.version = 11 : i64} {
  func.func @xgates_kernel(%arg0: i32, %arg1: i32, %arg2: memref<1x1x4x256xf32, #tpu.memory_space<vmem>>, %arg3: memref<32x36xbf16, #tpu.memory_space<vmem>>, %arg4: memref<32x1xf32, #tpu.memory_space<vmem>>, %arg5: memref<9x1x256xf32, #tpu.memory_space<vmem>>, %arg6: memref<1x1x32x256xf32, #tpu.memory_space<vmem>>) attributes {dimension_semantics = [#tpu.dimension_semantics<parallel>, #tpu.dimension_semantics<parallel>], iteration_bounds = array<i64: 2, 4>, scalar_prefetch = 0 : i64, scratch_operands = 0 : i64, tpu.core_type = #tpu.core_type<tc>, window_params = [{transform_indices = @transform_0, window_bounds = array<i64: 1, 1, 4, 256>}, {pipeline_mode = #tpu.pipeline_mode<synchronous>, transform_indices = @transform_1, window_bounds = array<i64: 32, 36>}, {pipeline_mode = #tpu.pipeline_mode<synchronous>, transform_indices = @transform_2, window_bounds = array<i64: 32, 1>}, {pipeline_mode = #tpu.pipeline_mode<synchronous>, transform_indices = @transform_3, window_bounds = array<i64: 9, 1, 256>}, {transform_indices = @transform_4, window_bounds = array<i64: 1, 1, 32, 256>}]} {
    %c0 = arith.constant 0 : index
    %c0_0 = arith.constant 0 : index
    %c0_1 = arith.constant 0 : index
    %c0_2 = arith.constant 0 : index
    %0 = vector.load %arg2[%c0, %c0_0, %c0_1, %c0_2] : memref<1x1x4x256xf32, #tpu.memory_space<vmem>>, vector<1x1x4x256xf32>
    %1 = vector.shape_cast %0 : vector<1x1x4x256xf32> to vector<4x256xf32>
    %c17_i32 = arith.constant 17 : i32
    %2 = tpu.dynamic_rotate %1 by %c17_i32 dim 1 : vector<4x256xf32>, i32 -> vector<4x256xf32>
    %c0_3 = arith.constant 0 : index
    %c0_4 = arith.constant 0 : index
    %c0_5 = arith.constant 0 : index
    %3 = vector.load %arg5[%c0_3, %c0_4, %c0_5] : memref<9x1x256xf32, #tpu.memory_space<vmem>>, vector<1x1x256xf32>
    %4 = vector.shape_cast %3 : vector<1x1x256xf32> to vector<1x256xf32>
    %5 = vector.broadcast %4 : vector<1x256xf32> to vector<4x256xf32>
    %6 = arith.mulf %2, %5 : vector<4x256xf32>
    %c16_i32 = arith.constant 16 : i32
    %7 = tpu.dynamic_rotate %1 by %c16_i32 dim 1 : vector<4x256xf32>, i32 -> vector<4x256xf32>
    %c1 = arith.constant 1 : index
    %c0_6 = arith.constant 0 : index
    %c0_7 = arith.constant 0 : index
    %8 = vector.load %arg5[%c1, %c0_6, %c0_7] : memref<9x1x256xf32, #tpu.memory_space<vmem>>, vector<1x1x256xf32>
    %9 = vector.shape_cast %8 : vector<1x1x256xf32> to vector<1x256xf32>
    %10 = vector.broadcast %9 : vector<1x256xf32> to vector<4x256xf32>
    %11 = arith.mulf %7, %10 : vector<4x256xf32>
    %c15_i32 = arith.constant 15 : i32
    %12 = tpu.dynamic_rotate %1 by %c15_i32 dim 1 : vector<4x256xf32>, i32 -> vector<4x256xf32>
    %c2 = arith.constant 2 : index
    %c0_8 = arith.constant 0 : index
    %c0_9 = arith.constant 0 : index
    %13 = vector.load %arg5[%c2, %c0_8, %c0_9] : memref<9x1x256xf32, #tpu.memory_space<vmem>>, vector<1x1x256xf32>
    %14 = vector.shape_cast %13 : vector<1x1x256xf32> to vector<1x256xf32>
    %15 = vector.broadcast %14 : vector<1x256xf32> to vector<4x256xf32>
    %16 = arith.mulf %12, %15 : vector<4x256xf32>
    %c1_i32 = arith.constant 1 : i32
    %17 = tpu.dynamic_rotate %1 by %c1_i32 dim 1 : vector<4x256xf32>, i32 -> vector<4x256xf32>
    %c3 = arith.constant 3 : index
    %c0_10 = arith.constant 0 : index
    %c0_11 = arith.constant 0 : index
    %18 = vector.load %arg5[%c3, %c0_10, %c0_11] : memref<9x1x256xf32, #tpu.memory_space<vmem>>, vector<1x1x256xf32>
    %19 = vector.shape_cast %18 : vector<1x1x256xf32> to vector<1x256xf32>
    %20 = vector.broadcast %19 : vector<1x256xf32> to vector<4x256xf32>
    %21 = arith.mulf %17, %20 : vector<4x256xf32>
    %c4 = arith.constant 4 : index
    %c0_12 = arith.constant 0 : index
    %c0_13 = arith.constant 0 : index
    %22 = vector.load %arg5[%c4, %c0_12, %c0_13] : memref<9x1x256xf32, #tpu.memory_space<vmem>>, vector<1x1x256xf32>
    %23 = vector.shape_cast %22 : vector<1x1x256xf32> to vector<1x256xf32>
    %24 = vector.broadcast %23 : vector<1x256xf32> to vector<4x256xf32>
    %25 = arith.mulf %1, %24 : vector<4x256xf32>
    %c255_i32 = arith.constant 255 : i32
    %26 = tpu.dynamic_rotate %1 by %c255_i32 dim 1 : vector<4x256xf32>, i32 -> vector<4x256xf32>
    %c5 = arith.constant 5 : index
    %c0_14 = arith.constant 0 : index
    %c0_15 = arith.constant 0 : index
    %27 = vector.load %arg5[%c5, %c0_14, %c0_15] : memref<9x1x256xf32, #tpu.memory_space<vmem>>, vector<1x1x256xf32>
    %28 = vector.shape_cast %27 : vector<1x1x256xf32> to vector<1x256xf32>
    %29 = vector.broadcast %28 : vector<1x256xf32> to vector<4x256xf32>
    %30 = arith.mulf %26, %29 : vector<4x256xf32>
    %c241_i32 = arith.constant 241 : i32
    %31 = tpu.dynamic_rotate %1 by %c241_i32 dim 1 : vector<4x256xf32>, i32 -> vector<4x256xf32>
    %c6 = arith.constant 6 : index
    %c0_16 = arith.constant 0 : index
    %c0_17 = arith.constant 0 : index
    %32 = vector.load %arg5[%c6, %c0_16, %c0_17] : memref<9x1x256xf32, #tpu.memory_space<vmem>>, vector<1x1x256xf32>
    %33 = vector.shape_cast %32 : vector<1x1x256xf32> to vector<1x256xf32>
    %34 = vector.broadcast %33 : vector<1x256xf32> to vector<4x256xf32>
    %35 = arith.mulf %31, %34 : vector<4x256xf32>
    %c240_i32 = arith.constant 240 : i32
    %36 = tpu.dynamic_rotate %1 by %c240_i32 dim 1 : vector<4x256xf32>, i32 -> vector<4x256xf32>
    %c7 = arith.constant 7 : index
    %c0_18 = arith.constant 0 : index
    %c0_19 = arith.constant 0 : index
    %37 = vector.load %arg5[%c7, %c0_18, %c0_19] : memref<9x1x256xf32, #tpu.memory_space<vmem>>, vector<1x1x256xf32>
    %38 = vector.shape_cast %37 : vector<1x1x256xf32> to vector<1x256xf32>
    %39 = vector.broadcast %38 : vector<1x256xf32> to vector<4x256xf32>
    %40 = arith.mulf %36, %39 : vector<4x256xf32>
    %c239_i32 = arith.constant 239 : i32
    %41 = tpu.dynamic_rotate %1 by %c239_i32 dim 1 : vector<4x256xf32>, i32 -> vector<4x256xf32>
    %c8 = arith.constant 8 : index
    %c0_20 = arith.constant 0 : index
    %c0_21 = arith.constant 0 : index
    %42 = vector.load %arg5[%c8, %c0_20, %c0_21] : memref<9x1x256xf32, #tpu.memory_space<vmem>>, vector<1x1x256xf32>
    %43 = vector.shape_cast %42 : vector<1x1x256xf32> to vector<1x256xf32>
    %44 = vector.broadcast %43 : vector<1x256xf32> to vector<4x256xf32>
    %45 = arith.mulf %41, %44 : vector<4x256xf32>
    %46 = tpu.concatenate %6, %11, %16, %21, %25, %30, %35, %40, %45 in 0 : vector<4x256xf32>, vector<4x256xf32>, vector<4x256xf32>, vector<4x256xf32>, vector<4x256xf32>, vector<4x256xf32>, vector<4x256xf32>, vector<4x256xf32>, vector<4x256xf32> -> vector<36x256xf32>
    %c0_22 = arith.constant 0 : index
    %c0_23 = arith.constant 0 : index
    %47 = vector.load %arg3[%c0_22, %c0_23] : memref<32x36xbf16, #tpu.memory_space<vmem>>, vector<32x36xbf16>
    %48 = arith.truncf %46 : vector<36x256xf32> to vector<36x256xbf16>
    %cst = arith.constant dense<0.000000e+00> : vector<32x256xf32>
    %49 = tpu.matmul %47, %48, %cst {dimension_numbers = #tpu.dot_dimension_numbers<[1], [0], [0], [1], [0, 0, 1, 1], [], []>} : vector<32x36xbf16>, vector<36x256xbf16>, vector<32x256xf32> -> vector<32x256xf32>
    %c0_24 = arith.constant 0 : index
    %c0_25 = arith.constant 0 : index
    %50 = vector.load %arg4[%c0_24, %c0_25] : memref<32x1xf32, #tpu.memory_space<vmem>>, vector<32x1xf32>
    %51 = vector.broadcast %50 : vector<32x1xf32> to vector<32x256xf32>
    %52 = arith.addf %49, %51 : vector<32x256xf32>
    %c0_26 = arith.constant 0 : index
    %c0_27 = arith.constant 0 : index
    %c0_28 = arith.constant 0 : index
    %c0_29 = arith.constant 0 : index
    %53 = vector.load %arg6[%c0_26, %c0_27, %c0_28, %c0_29] : memref<1x1x32x256xf32, #tpu.memory_space<vmem>>, vector<1x1x32x256xf32>
    %54 = vector.shape_cast %53 : vector<1x1x32x256xf32> to vector<32x256xf32>
    %55 = vector.shape_cast %52 : vector<32x256xf32> to vector<1x1x32x256xf32>
    tpu.vector_store %arg6[%c0_26, %c0_27, %c0_28, %c0_29], %55 {strides = array<i32>} : memref<1x1x32x256xf32, #tpu.memory_space<vmem>>, vector<1x1x32x256xf32>,
    return
  }
  func.func @transform_0(%arg0: i32, %arg1: i32) -> (i32, i32, i32, i32) {
    %c0_i32 = arith.constant 0 : i32
    %c0_i32_0 = arith.constant 0 : i32
    %c0_i32_1 = arith.constant 0 : i32
    return %arg0, %arg1, %c0_i32, %c0_i32_0 : i32, i32, i32, i32
  }
  func.func @transform_1(%arg0: i32, %arg1: i32) -> (i32, i32) {
    %c0_i32 = arith.constant 0 : i32
    %c0_i32_0 = arith.constant 0 : i32
    %c0_i32_1 = arith.constant 0 : i32
    return %c0_i32, %c0_i32_0 : i32, i32
  }
  func.func @transform_2(%arg0: i32, %arg1: i32) -> (i32, i32) {
    %c0_i32 = arith.constant 0 : i32
    %c0_i32_0 = arith.constant 0 : i32
    %c0_i32_1 = arith.constant 0 : i32
    return %c0_i32, %c0_i32_0 : i32, i32
  }
  func.func @transform_3(%arg0: i32, %arg1: i32) -> (i32, i32, i32) {
    %c0_i32 = arith.constant 0 : i32
    %c0_i32_0 = arith.constant 0 : i32
    %c0_i32_1 = arith.constant 0 : i32
    %c0_i32_2 = arith.constant 0 : i32
    return %c0_i32, %c0_i32_0, %c0_i32_1 : i32, i32, i32
  }
  func.func @transform_4(%arg0: i32, %arg1: i32) -> (i32, i32, i32, i32) {
    %c0_i32 = arith.constant 0 : i32
    %c0_i32_0 = arith.constant 0 : i32
    %c0_i32_1 = arith.constant 0 : i32
    return %arg0, %arg1, %c0_i32, %c0_i32_0 : i32, i32, i32, i32
  }
}

</mosaic_0001>

<llo_original>
// kernel: tpu_custom_call.1
$region0: #{tpu_custom_call.1}
  #allocation0 [shape = 'u32[]', space=smem, size = 0x4, offset = 0x4, fixed_abs, tag = 'smem constant byte address 0x4 - core index']
  #allocation1 [shape = 'u32[144,128]{1,0:T(1,128)}', space=vmem, size = 0x12000, scoped, tag = 'internal scratch']
  %s0 = inlined_call_operand.hbm [shape: f32[2,4,4,256], index: 0, kind: input, shape index: {}]
  %s1 = inlined_call_operand.vmem [shape: bf16[32,36], index: 1, kind: input, shape index: {}]
  %s2 = inlined_call_operand.vmem [shape: f32[32,1], index: 2, kind: input, shape index: {}]
  %s3 = inlined_call_operand.vmem [shape: f32[9,1,256], index: 3, kind: input, shape index: {}]
  %s4 = inlined_call_operand.hbm [shape: f32[2,4,32,256], index: 4, kind: output, shape index: {}]
  %s5 = sld [smem:[#allocation0]]
  $region53: #{tpu_custom_call.1} parent=0
    _
  %s7 = ssub.s32 1, %s5
  %s8 = scalar_select 0, %s7, %s5
  $region1: #{tpu_custom_call.1} parent=0
    #allocation2 [shape = 'u8[8192]{0}', space=vmem, size = 0x2000, scoped, tag = 'input window, operand 0']
    #allocation3 [shape = 's32[2]{0}', space=sflag, size = 0x8, scoped, tag = 'scoped memory for tpu_custom_call.1']
    #allocation4 [shape = 's32[2]{0}', space=sflag, size = 0x8, scoped, tag = 'scoped memory for tpu_custom_call.1']
    #allocation5 [shape = 'u8[65536]{0}', space=vmem, size = 0x10000, scoped, tag = 'output window, operand 0']
    %9 = vsyncpa [#allocation3], 0
    %s10 = scalar_lea.sflag [#allocation3], 1
    %11 = vsyncpa %s10, 0
    %12 = vsyncpa [#allocation4], 0
    %s13 = scalar_lea.sflag [#allocation4], 1
    %14 = vsyncpa %s13, 0
    loop: start=0, step=1, limit=10
    $region2: #{tpu_custom_call.1} parent=1 // loop_pre_header
      _
    $region3: #{tpu_custom_call.1} parent=1 // loop_header
      %s16 = sphi 0, %s20
      %p17 = scmp.ge.s32.totalorder %s16, 10
      %s23 = sphi 0, %s35
      %s24 = sphi 0, %s31
      %s25 = sphi 0, %s23
      %s26 = sphi 0, %s24
      %s27 = sphi 0, %s25
      %s28 = sphi 0, %s26
      %s40 = sphi 0, %s42
      %s43 = sphi 0, %s40
      %s44 = sphi 0, %s43
      %s60 = sphi 0, %s44
      %s64 = sphi 0, %s64
      %s66 = sphi 0, %s64
      %s67 = sphi 0, %s66
      %s81 = sphi 0, %s67
      %s85 = sphi 0, %s85
      %s87 = sphi 0, %s85
      %s88 = sphi 0, %s87
      %s102 = sphi 0, %s88
      %s106 = sphi 0, %s106
      %s108 = sphi 0, %s106
      %s109 = sphi 0, %s108
      %s123 = sphi 0, %s109
      %s131 = sphi 0, %s133
      %s134 = sphi 0, %s131
      %s135 = sphi 0, %s134
      %s151 = sphi 0, %s135
    $region4: #{tpu_custom_call.1} parent=1 // loop_header_branch
      %19 = sbr.rel (%p17) target = $region8
    $region5: #{tpu_custom_call.1} parent=1 // loop_body
      %s21 = ssub.s32 %s16, 1
      %s22 = ssub.s32 %s16, 2
      %s29 = sadd.s32 1, %s24
      %p30 = scmp.ge.s32.totalorder %s29, 4
      %s31 = scalar_select %p30, 0, %s29
      %s32 = sadd.s32 1, %s23
      %s33 = scalar_select %p30, %s32, %s23
      %p34 = scmp.ge.s32.totalorder %s33, 2
      %s35 = scalar_select %p34, 0, %s33
      %s36 = ssub.s32 %s23, %s35
      %s37 = ssub.s32 %s24, %s31
      %s38 = sor.u32 %s36, %s37
      %p39 = scmp.eq.s32.totalorder %s38, 0
      %s41 = sadd.s32 %s40, 1
      %s42 = scalar_select %p39, %s40, %s41
      %p45 = pneg %p39
      %p46 = scmp.eq.s32.totalorder %s16, 7
      %p47 = por %p45, %p46
      %p48 = scmp.ne.s32.totalorder %s40, %s43
      %p49 = scmp.eq.s32.totalorder %s16, 0
      %p50 = por %p48, %p49
      %p51 = scmp.ne.s32.totalorder %s40, %s43
      %p52 = scmp.eq.s32.totalorder %s21, 7
      %p53 = por %p51, %p52
      %p54 = scmp.ne.s32.totalorder %s43, %s44
      %p55 = scmp.eq.s32.totalorder %s21, 0
      %p56 = por %p54, %p55
      %p57 = scmp.ne.s32.totalorder %s43, %s44
      %p58 = scmp.eq.s32.totalorder %s22, 7
      %p59 = por %p57, %p58
      %p61 = scmp.ne.s32.totalorder %s44, %s60
      %p62 = scmp.eq.s32.totalorder %s22, 0
      %p63 = por %p61, %p62
      %s65 = sadd.s32 %s64, 1
      %p68 = scmp.eq.s32.totalorder %s16, 7
      %p69 = scmp.ne.s32.totalorder %s64, %s66
      %p70 = scmp.eq.s32.totalorder %s16, 0
      %p71 = por %p69, %p70
      %p72 = scmp.ne.s32.totalorder %s64, %s66
      %p73 = scmp.eq.s32.totalorder %s21, 7
      %p74 = por %p72, %p73
      %p75 = scmp.ne.s32.totalorder %s66, %s67
      %p76 = scmp.eq.s32.totalorder %s21, 0
      %p77 = por %p75, %p76
      %p78 = scmp.ne.s32.totalorder %s66, %s67
      %p79 = scmp.eq.s32.totalorder %s22, 7
      %p80 = por %p78, %p79
      %p82 = scmp.ne.s32.totalorder %s67, %s81
      %p83 = scmp.eq.s32.totalorder %s22, 0
      %p84 = por %p82, %p83
      %s86 = sadd.s32 %s85, 1
      %p89 = scmp.eq.s32.totalorder %s16, 7
      %p90 = scmp.ne.s32.totalorder %s85, %s87
      %p91 = scmp.eq.s32.totalorder %s16, 0
      %p92 = por %p90, %p91
      %p93 = scmp.ne.s32.totalorder %s85, %s87
      %p94 = scmp.eq.s32.totalorder %s21, 7
      %p95 = por %p93, %p94
      %p96 = scmp.ne.s32.totalorder %s87, %s88
      %p97 = scmp.eq.s32.totalorder %s21, 0
      %p98 = por %p96, %p97
      %p99 = scmp.ne.s32.totalorder %s87, %s88
      %p100 = scmp.eq.s32.totalorder %s22, 7
      %p101 = por %p99, %p100
      %p103 = scmp.ne.s32.totalorder %s88, %s102
      %p104 = scmp.eq.s32.totalorder %s22, 0
      %p105 = por %p103, %p104
      %s107 = sadd.s32 %s106, 1
      %p110 = scmp.eq.s32.totalorder %s16, 7
      %p111 = scmp.ne.s32.totalorder %s106, %s108
      %p112 = scmp.eq.s32.totalorder %s16, 0
      %p113 = por %p111, %p112
      %p114 = scmp.ne.s32.totalorder %s106, %s108
      %p115 = scmp.eq.s32.totalorder %s21, 7
      %p116 = por %p114, %p115
      %p117 = scmp.ne.s32.totalorder %s108, %s109
      %p118 = scmp.eq.s32.totalorder %s21, 0
      %p119 = por %p117, %p118
      %p120 = scmp.ne.s32.totalorder %s108, %s109
      %p121 = scmp.eq.s32.totalorder %s22, 7
      %p122 = por %p120, %p121
      %p124 = scmp.ne.s32.totalorder %s109, %s123
      %p125 = scmp.eq.s32.totalorder %s22, 0
      %p126 = por %p124, %p125
      %s127 = ssub.s32 %s23, %s35
      %s128 = ssub.s32 %s24, %s31
      %s129 = sor.u32 %s127, %s128
      %p130 = scmp.eq.s32.totalorder %s129, 0
      %s132 = sadd.s32 %s131, 1
      %s133 = scalar_select %p130, %s131, %s132
      %p136 = pneg %p130
      %p137 = scmp.eq.s32.totalorder %s16, 7
      %p138 = por %p136, %p137
      %p139 = scmp.ne.s32.totalorder %s131, %s134
      %p140 = scmp.eq.s32.totalorder %s16, 0
      %p141 = por %p139, %p140
      %p142 = scmp.ne.s32.totalorder %s131, %s134
      %p143 = scmp.eq.s32.totalorder %s21, 7
      %p144 = por %p142, %p143
      %p145 = scmp.ne.s32.totalorder %s134, %s135
      %p146 = scmp.eq.s32.totalorder %s21, 0
      %p147 = por %p145, %p146
      %p148 = scmp.ne.s32.totalorder %s134, %s135
      %p149 = scmp.eq.s32.totalorder %s22, 7
      %p150 = por %p148, %p149
      %p152 = scmp.ne.s32.totalorder %s135, %s151
      %p153 = scmp.eq.s32.totalorder %s22, 0
      %p154 = por %p152, %p153
      %p155 = scmp.le.s32.totalorder 1, %s16
      %p156 = scmp.lt.s32.totalorder %s16, 9
      %p157 = pnand %p155, %p156
      %p158 = pneg %p157
      // Predicated region
      $region9: #{tpu_custom_call.1} parent=5 // pred_check
        _
      $region10: #{tpu_custom_call.1} parent=5 // pred_check_branch
        %160 = sbr.rel (%p157) target = $region12
      $region11: #{tpu_custom_call.1} parent=5 // pred_region
        %s161 = ssub.s32 %s16, 1
        // Predicated region
        $region13: #{tpu_custom_call.1} parent=11 // pred_check
          %p162 = pneg %p77
        $region14: #{tpu_custom_call.1} parent=11 // pred_check_branch
          %164 = sbr.rel (%p162) target = $region16
        $region15: #{tpu_custom_call.1} parent=11 // pred_region
          _
        $region16: #{tpu_custom_call.1} parent=11 // pred_fallthru
          _
        // Predicated region
        $region17: #{tpu_custom_call.1} parent=11 // pred_check
          %p165 = pneg %p98
        $region18: #{tpu_custom_call.1} parent=11 // pred_check_branch
          %167 = sbr.rel (%p165) target = $region20
        $region19: #{tpu_custom_call.1} parent=11 // pred_region
          _
        $region20: #{tpu_custom_call.1} parent=11 // pred_fallthru
          _
        // Predicated region
        $region21: #{tpu_custom_call.1} parent=11 // pred_check
          %p168 = pneg %p119
        $region22: #{tpu_custom_call.1} parent=11 // pred_check_branch
          %170 = sbr.rel (%p168) target = $region24
        $region23: #{tpu_custom_call.1} parent=11 // pred_region
          _
        $region24: #{tpu_custom_call.1} parent=11 // pred_fallthru
          _
      $region12: #{tpu_custom_call.1} parent=5 // pred_fallthru
        _
      %p171 = scmp.lt.s32.totalorder %s16, 8
      // Predicated region
      $region25: #{tpu_custom_call.1} parent=5 // pred_check
        %p172 = pneg %p171
      $region26: #{tpu_custom_call.1} parent=5 // pred_check_branch
        %174 = sbr.rel (%p172) target = $region28
      $region27: #{tpu_custom_call.1} parent=5 // pred_region
        // Predicated region
        $region29: #{tpu_custom_call.1} parent=27 // pred_check
          %p175 = pneg %p50
        $region30: #{tpu_custom_call.1} parent=27 // pred_check_branch
          %177 = sbr.rel (%p175) target = $region32
        $region31: #{tpu_custom_call.1} parent=27 // pred_region
          %s178 = sand.u32 %s40, 1
          %s179 = scalar_lea.sflag [#allocation3], %s178
          %s180 = sand.u32 %s40, 1
          %s181 = smul.addr %s180, 8
          %s182 = scalar_lea.vmem [#allocation2], %s181
          %s184 = ssub.s32 128, 128
          %185 = vsyncadd %s179, %s184
          %s186 = smul.addr %s24, 2
          %s187 = smul.addr %s23, 8
          %s188 = sadd.s32 %s186, %s187
          %s189 = smul.addr %s188, 64
          %s190 = scalar_lea.hbm %s0, %s189
          %s192 = sshll.u32 %s182, 4
          %s193 = int_to_ptr.vmem [resolvable:$true] %s192
          %195 = dma.hbm_to_vmem [thread:$0]  %s190, 128, %s193, %s179
        $region32: #{tpu_custom_call.1} parent=27 // pred_fallthru
          _
      $region28: #{tpu_custom_call.1} parent=5 // pred_fallthru
        _
      %p196 = scmp.le.s32.totalorder 1, %s16
      %p197 = scmp.lt.s32.totalorder %s16, 9
      %p198 = pnand %p196, %p197
      %p199 = pneg %p198
      // Predicated region
      $region33: #{tpu_custom_call.1} parent=5 // pred_check
        _
      $region34: #{tpu_custom_call.1} parent=5 // pred_check_branch
        %201 = sbr.rel (%p198) target = $region36
      $region35: #{tpu_custom_call.1} parent=5 // pred_region
        %s202 = ssub.s32 %s16, 1
        %s203 = sand.u32 %s43, 1
        %s204 = scalar_lea.sflag [#allocation3], %s203
        %s205 = sand.u32 %s43, 1
        %s206 = smul.addr %s205, 8
        %s207 = scalar_lea.vmem [#allocation2], %s206
        // Predicated region
        $region37: #{tpu_custom_call.1} parent=35 // pred_check
          %p208 = pneg %p56
        $region38: #{tpu_custom_call.1} parent=35 // pred_check_branch
          %210 = sbr.rel (%p208) target = $region40
        $region39: #{tpu_custom_call.1} parent=35 // pred_region
          %211 = dma.done %s204, 128
        $region40: #{tpu_custom_call.1} parent=35 // pred_fallthru
          _
        %s212 = sand.u32 %s43, 1
        %s213 = scalar_lea.sflag [#allocation3], %s212
        %s214 = sand.u32 %s43, 1
        %s215 = smul.addr %s214, 8
        %s216 = scalar_lea.vmem [#allocation2], %s215
        %p217 = pneg %p56
        %p218 = pneg %p53
        %p219 = pneg %p77
        %p220 = pneg %p74
        %p221 = pneg %p98
        %p222 = pneg %p95
        %p223 = pneg %p119
        %p224 = pneg %p116
        %p225 = pneg %p147
        %p226 = pneg %p144
        %s227 = sand.u32 %s134, 1
        %s228 = scalar_lea.sflag [#allocation4], %s227
        %s229 = sand.u32 %s134, 1
        %s230 = smul.addr %s229, 64
        %s231 = scalar_lea.vmem [#allocation5], %s230
        %v233 = vld [vmem:[%s207] sm:$0xff]
        %v235 = vcombine.high %v233, %v233
        %237 = vrot.lane.b32.xlu0 %v233, 17
        %v238 = vpop.permute.xlu0 %237
        %239 = vrot.lane.b32.xlu0 %v235, 17
        %v240 = vpop.permute.xlu0 %239
        %v241 = vlaneseq
        %v242 = vand.u32 %v241, 127
        %vm243 = vcmp.lt.s32.totalorder %v242, 17
        %v244 = vsel %vm243, %v238, %v240
        %v245 = vsel %vm243, %v240, %v238
        %v246 = vld [vmem:[%s3] sm:$0x3]
        %v248 = vlaneseq
        %v249 = vshrl.u32 %v248, 7
        %v250 = vsub.s32 0, %v249
        %v251 = vrot.slane %v246, %v250
        %v252 = vlaneseq
        %v253 = vshrl.u32 %v252, 7
        %v254 = vsub.s32 1, %v253
        %v255 = vrot.slane %v246, %v254
        %v258 = vmul.f32 %v245, %v251
        %v259 = vmul.f32 %v244, %v255
        %260 = vrot.lane.b32.xlu0 %v233, 16
        %v261 = vpop.permute.xlu0 %260
        %262 = vrot.lane.b32.xlu0 %v235, 16
        %v263 = vpop.permute.xlu0 %262
        %vm264 = vcmp.lt.s32.totalorder %v242, 16
        %v265 = vsel %vm264, %v261, %v263
        %v266 = vsel %vm264, %v263, %v261
        %s267 = scalar_lea.vmem %s3, 2
        %v268 = vld [vmem:[%s267] sm:$0x3]
        %v270 = vlaneseq
        %v271 = vshrl.u32 %v270, 7
        %v272 = vsub.s32 0, %v271
        %v273 = vrot.slane %v268, %v272
        %v274 = vlaneseq
        %v275 = vshrl.u32 %v274, 7
        %v276 = vsub.s32 1, %v275
        %v277 = vrot.slane %v268, %v276
        %v280 = vmul.f32 %v266, %v273
        %v281 = vmul.f32 %v265, %v277
        %282 = vrot.lane.b32.xlu0 %v233, 15
        %v283 = vpop.permute.xlu0 %282
        %284 = vrot.lane.b32.xlu0 %v235, 15
        %v285 = vpop.permute.xlu0 %284
        %vm286 = vcmp.lt.s32.totalorder %v242, 15
        %v287 = vsel %vm286, %v283, %v285
        %v288 = vsel %vm286, %v285, %v283
        %s289 = scalar_lea.vmem %s3, 4
        %v290 = vld [vmem:[%s289] sm:$0x3]
        %v292 = vlaneseq
        %v293 = vshrl.u32 %v292, 7
        %v294 = vsub.s32 0, %v293
        %v295 = vrot.slane %v290, %v294
        %v296 = vlaneseq
        %v297 = vshrl.u32 %v296, 7
        %v298 = vsub.s32 1, %v297
        %v299 = vrot.slane %v290, %v298
        %v302 = vmul.f32 %v288, %v295
        %v303 = vmul.f32 %v287, %v299
        %304 = vrot.lane.b32.xlu0 %v233, 1
        %v305 = vpop.permute.xlu0 %304
        %306 = vrot.lane.b32.xlu0 %v235, 1
        %v307 = vpop.permute.xlu0 %306
        %vm308 = vcmp.lt.s32.totalorder %v242, 1
        %v309 = vsel %vm308, %v305, %v307
        %v310 = vsel %vm308, %v307, %v305
        %s311 = scalar_lea.vmem %s3, 6
        %v312 = vld [vmem:[%s311] sm:$0x3]
        %v314 = vlaneseq
        %v315 = vshrl.u32 %v314, 7
        %v316 = vsub.s32 0, %v315
        %v317 = vrot.slane %v312, %v316
        %v318 = vlaneseq
        %v319 = vshrl.u32 %v318, 7
        %v320 = vsub.s32 1, %v319
        %v321 = vrot.slane %v312, %v320
        %v324 = vmul.f32 %v310, %v317
        %v325 = vmul.f32 %v309, %v321
        %s326 = scalar_lea.vmem %s3, 8
        %v327 = vld [vmem:[%s326] sm:$0x3]
        %v329 = vlaneseq
        %v330 = vshrl.u32 %v329, 7
        %v331 = vsub.s32 0, %v330
        %v332 = vrot.slane %v327, %v331
        %v333 = vlaneseq
        %v334 = vshrl.u32 %v333, 7
        %v335 = vsub.s32 1, %v334
        %v336 = vrot.slane %v327, %v335
        %v337 = vcombine.low %v332, %v336
        %v339 = vmul.f32 %v233, %v337
        %340 = vrot.lane.b32.xlu0 %v233, 127
        %v341 = vpop.permute.xlu0 %340
        %342 = vrot.lane.b32.xlu0 %v235, 127
        %v343 = vpop.permute.xlu0 %342
        %vm344 = vcmp.lt.s32.totalorder %v242, 127
        %v345 = vsel %vm344, %v341, %v343
        %v346 = vsel %vm344, %v343, %v341
        %s347 = scalar_lea.vmem %s3, 10
        %v348 = vld [vmem:[%s347] sm:$0x3]
        %v350 = vlaneseq
        %v351 = vshrl.u32 %v350, 7
        %v352 = vsub.s32 0, %v351
        %v353 = vrot.slane %v348, %v352
        %v354 = vlaneseq
        %v355 = vshrl.u32 %v354, 7
        %v356 = vsub.s32 1, %v355
        %v357 = vrot.slane %v348, %v356
        %v360 = vmul.f32 %v345, %v353
        %v361 = vmul.f32 %v346, %v357
        %362 = vrot.lane.b32.xlu0 %v233, 113
        %v363 = vpop.permute.xlu0 %362
        %364 = vrot.lane.b32.xlu0 %v235, 113
        %v365 = vpop.permute.xlu0 %364
        %vm366 = vcmp.lt.s32.totalorder %v242, 113
        %v367 = vsel %vm366, %v363, %v365
        %v368 = vsel %vm366, %v365, %v363
        %s369 = scalar_lea.vmem %s3, 12
        %v370 = vld [vmem:[%s369] sm:$0x3]
        %v372 = vlaneseq
        %v373 = vshrl.u32 %v372, 7
        %v374 = vsub.s32 0, %v373
        %v375 = vrot.slane %v370, %v374
        %v376 = vlaneseq
        %v377 = vshrl.u32 %v376, 7
        %v378 = vsub.s32 1, %v377
        %v379 = vrot.slane %v370, %v378
        %v382 = vmul.f32 %v367, %v375
        %v383 = vmul.f32 %v368, %v379
        %384 = vrot.lane.b32.xlu0 %v233, 112
        %v385 = vpop.permute.xlu0 %384
        %386 = vrot.lane.b32.xlu0 %v235, 112
        %v387 = vpop.permute.xlu0 %386
        %vm388 = vcmp.lt.s32.totalorder %v242, 112
        %v389 = vsel %vm388, %v385, %v387
        %v390 = vsel %vm388, %v387, %v385
        %s391 = scalar_lea.vmem %s3, 14
        %v392 = vld [vmem:[%s391] sm:$0x3]
        %v394 = vlaneseq
        %v395 = vshrl.u32 %v394, 7
        %v396 = vsub.s32 0, %v395
        %v397 = vrot.slane %v392, %v396
        %v398 = vlaneseq
        %v399 = vshrl.u32 %v398, 7
        %v400 = vsub.s32 1, %v399
        %v401 = vrot.slane %v392, %v400
        %v404 = vmul.f32 %v389, %v397
        %v405 = vmul.f32 %v390, %v401
        %406 = vrot.lane.b32.xlu0 %v233, 111
        %v407 = vpop.permute.xlu0 %406
        %408 = vrot.lane.b32.xlu0 %v235, 111
        %v409 = vpop.permute.xlu0 %408
        %vm410 = vcmp.lt.s32.totalorder %v242, 111
        %v411 = vsel %vm410, %v407, %v409
        %v412 = vsel %vm410, %v409, %v407
        %s413 = scalar_lea.vmem %s3, 16
        %v414 = vld [vmem:[%s413] sm:$0x3]
        %v416 = vlaneseq
        %v417 = vshrl.u32 %v416, 7
        %v418 = vsub.s32 0, %v417
        %v419 = vrot.slane %v414, %v418
        %v420 = vlaneseq
        %v421 = vshrl.u32 %v420, 7
        %v422 = vsub.s32 1, %v421
        %v423 = vrot.slane %v414, %v422
        %v426 = vmul.f32 %v411, %v419
        %v427 = vmul.f32 %v412, %v423
        %v430 = vrot.slane %v280, 4
        %v431 = vrot.slane %v281, 4
        %v436 = vrot.slane %v324, 4
        %v437 = vrot.slane %v325, 4
        %v441 = vcombine.high %v339, %v339
        %v445 = vrot.slane %v360, 4
        %v446 = vrot.slane %v361, 4
        %v451 = vrot.slane %v404, 4
        %v452 = vrot.slane %v405, 4
        %vm455 = vcmask 1043456
        %v456 = vsel %vm455, %v258, %v430
        %v457 = vsel %vm455, %v259, %v431
        %v458 = vsel %vm455, %v302, %v436
        %v459 = vsel %vm455, %v303, %v437
        %v460 = vsel %vm455, %v339, %v445
        %v461 = vsel %vm455, %v441, %v446
        %v462 = vsel %vm455, %v382, %v451
        %v463 = vsel %vm455, %v383, %v452
        %v464 = vld [vmem:[%s1] sm:$0xf]
        %v465 = vld [vmem:[%s1 + $0x4] sm:$0xf]
        %v466 = vld [vmem:[%s1 + $0x8] sm:$0xf]
        %v467 = vld [vmem:[%s1 + $0xc] sm:$0xf]
        %v468 = vpack.c.bf16 %v458, %v456
        %v469 = vpack.c.bf16 %v459, %v457
        %v470 = vpack.c.bf16 %v462, %v460
        %v471 = vpack.c.bf16 %v463, %v461
        %v472 = vpack.c.bf16 %v426, %v426
        %v473 = vpack.c.bf16 %v427, %v427
        %v474 = vld [vmem:[%s2] sm:$0xff]
        %v475 = vld [vmem:[%s2 + $0x8] sm:$0xff]
        %v476 = vld [vmem:[%s2 + $0x10] sm:$0xff]
        %v477 = vld [vmem:[%s2 + $0x18] sm:$0xff]
        %479 = vset.pattern.permute.xlu0 0
        %480 = vperm.xlu0 %479, %v474
        %v481 = vpop.permute.xlu0 %480
        %484 = vset.pattern.permute.xlu0 0
        %485 = vperm.xlu0 %484, %v475
        %v486 = vpop.permute.xlu0 %485
        %489 = vset.pattern.permute.xlu0 0
        %490 = vperm.xlu0 %489, %v476
        %v491 = vpop.permute.xlu0 %490
        %494 = vset.pattern.permute.xlu0 0
        %495 = vperm.xlu0 %494, %v477
        %v496 = vpop.permute.xlu0 %495
        %v502 = vunpack.c.l.b16 %v464
        %v503 = vunpack.c.l.b16 %v465
        %v504 = vunpack.c.l.b16 %v466
        %v505 = vunpack.c.l.b16 %v467
        %v506 = vpack.c.b16 %v503, %v502
        %v507 = vpack.c.b16 %v505, %v504
        %vm508 = vcmask 293888
        %v510 = vsel %vm508, %v506, 0
        %v513 = vsel %vm508, %v507, 0
        %vm515 = vcmask 1041408
        %v517 = vsel %vm515, %v472, 0
        %v520 = vsel %vm515, %v473, 0
        %522 = vmatprep.subr.bf16.mxu0 %v469
        %523 = vmatpush1.bf16.msra.mxu0 %v468
        %524 = vmatprep.subr.bf16.mxu0 %v471
        %525 = vmatpush1.bf16.msra.mxu0 %v470
        %526 = vmatprep.subr.bf16.mxu0 %v520
        %527 = vmatpush1.bf16.msra.mxu0 %v517
        %528 = vmatprep.subr.bf16.mxu0 0
        %529 = vmatpush1.bf16.msra.mxu0 0
        %530 = vmatprep.subr.bf16.mxu0 0
        %531 = vmatpush1.bf16.msra.mxu0 0
        %532 = vmatprep.subr.bf16.mxu0 0
        %533 = vmatpush1.bf16.msra.mxu0 0
        %534 = vmatprep.subr.bf16.mxu0 0
        %535 = vmatpush1.bf16.msra.mxu0 0
        %536 = vmatprep.subr.bf16.mxu0 0
        %537 = vmatpush1.bf16.msra.mxu0 0
        %538 = vmatprep.subr.bf16.mxu0 0
        %539 = vmatpush1.bf16.msra.mxu0 0
        %540 = vmatprep.subr.bf16.mxu0 0
        %541 = vmatpush1.bf16.msra.mxu0 0
        %542 = vmatprep.subr.bf16.mxu0 0
        %543 = vmatpush1.bf16.msra.mxu0 0
        %544 = vmatprep.subr.bf16.mxu0 0
        %545 = vmatpush1.bf16.msra.mxu0 0
        %546 = vmatprep.subr.bf16.mxu0 0
        %547 = vmatpush1.bf16.msra.mxu0 0
        %548 = vmatprep.subr.bf16.mxu0 0
        %549 = vmatpush1.bf16.msra.mxu0 0
        %550 = vmatprep.subr.bf16.mxu0 0
        %551 = vmatpush1.bf16.msra.mxu0 0
        %552 = vmatprep.subr.bf16.mxu0 0
        %553 = vmatpush1.bf16.msra.mxu0 0
        %554 = vmatprep.mubr.bf16.mxu0 0
        %555 = vmatmul.mubr.bf16.gmra.mrb[0].mxu0 %v510
        %v556 = vpop.f32.mrb[0].mxu0
        %v557 = vadd.f32 %v481, %v556
        %v558 = vpop.f32.mrb[0].mxu0
        %v559 = vadd.f32 %v481, %v558
        %v560 = vpop.f32.mrb[0].mxu0
        %v561 = vadd.f32 %v486, %v560
        %v562 = vpop.f32.mrb[0].mxu0
        %v563 = vadd.f32 %v486, %v562
        %564 = vmatprep.mubr.bf16.mxu0 0
        %565 = vmatmul.mubr.bf16.gmra.mrb[0].mxu0 %v513
        %v566 = vpop.f32.mrb[0].mxu0
        %v567 = vadd.f32 %v491, %v566
        %v568 = vpop.f32.mrb[0].mxu0
        %v569 = vadd.f32 %v491, %v568
        %v570 = vpop.f32.mrb[0].mxu0
        %v571 = vadd.f32 %v496, %v570
        %v572 = vpop.f32.mrb[0].mxu0
        %v573 = vadd.f32 %v496, %v572
        %574 = vdwg.mxu0
        %575 = vst [vmem:[%s231] sm:$0xff] %v557
        %576 = vst [vmem:[%s231 + $0x8] sm:$0xff] %v559
        %577 = vst [vmem:[%s231 + $0x10] sm:$0xff] %v561
        %578 = vst [vmem:[%s231 + $0x18] sm:$0xff] %v563
        %579 = vst [vmem:[%s231 + $0x20] sm:$0xff] %v567
        %580 = vst [vmem:[%s231 + $0x28] sm:$0xff] %v569
        %581 = vst [vmem:[%s231 + $0x30] sm:$0xff] %v571
        %582 = vst [vmem:[%s231 + $0x38] sm:$0xff] %v573
        %s583 = sand.u32 %s134, 1
        %s584 = scalar_lea.sflag [#allocation4], %s583
        %s585 = sand.u32 %s134, 1
        %s586 = smul.addr %s585, 64
        %s587 = scalar_lea.vmem [#allocation5], %s586
        // Predicated region
        $region41: #{tpu_custom_call.1} parent=35 // pred_check
          %p588 = pneg %p144
        $region42: #{tpu_custom_call.1} parent=35 // pred_check_branch
          %590 = sbr.rel (%p588) target = $region44
        $region43: #{tpu_custom_call.1} parent=35 // pred_region
          %s592 = ssub.s32 1024, 1024
          %593 = vsyncadd %s584, %s592
          %s594 = smul.addr %s26, 8
          %s595 = smul.addr %s25, 32
          %s596 = sadd.s32 %s594, %s595
          %s597 = smul.addr %s596, 128
          %s598 = scalar_lea.hbm %s4, %s597
          %s599 = sshll.u32 %s587, 4
          %s600 = int_to_ptr.vmem [resolvable:$true] %s599
          %605 = dma.vmem_to_hbm [thread:$0]  %s600, 1024, %s598, %s584, 256, 256, 16
        $region44: #{tpu_custom_call.1} parent=35 // pred_fallthru
          _
      $region36: #{tpu_custom_call.1} parent=5 // pred_fallthru
        _
      %p606 = scmp.le.s32.totalorder 2, %s16
      // Predicated region
      $region45: #{tpu_custom_call.1} parent=5 // pred_check
        %p607 = pneg %p606
      $region46: #{tpu_custom_call.1} parent=5 // pred_check_branch
        %609 = sbr.rel (%p607) target = $region48
      $region47: #{tpu_custom_call.1} parent=5 // pred_region
        %s610 = ssub.s32 %s16, 2
        // Predicated region
        $region49: #{tpu_custom_call.1} parent=47 // pred_check
          %p611 = pneg %p150
        $region50: #{tpu_custom_call.1} parent=47 // pred_check_branch
          %613 = sbr.rel (%p611) target = $region52
        $region51: #{tpu_custom_call.1} parent=47 // pred_region
          %s614 = sand.u32 %s135, 1
          %s615 = scalar_lea.sflag [#allocation4], %s614
          %s616 = sand.u32 %s135, 1
          %s617 = smul.addr %s616, 64
          %s618 = scalar_lea.vmem [#allocation5], %s617
          %619 = dma.done %s615, 1024
        $region52: #{tpu_custom_call.1} parent=47 // pred_fallthru
          _
      $region48: #{tpu_custom_call.1} parent=5 // pred_fallthru
        _
    $region6: #{tpu_custom_call.1} parent=1 // loop_footer
      %s20 = sadd.s32 1, %s16
    $region7: #{tpu_custom_call.1} parent=1 // loop_footer_branch
      %15 = sbr.rel target = $region3
    $region8: #{tpu_custom_call.1} parent=1 // loop_exit
      _
    %620 = vsyncpa [#allocation3], 1
    %s621 = scalar_lea.sflag [#allocation3], 1
    %622 = vsyncpa %s621, 1
    %623 = vsyncpa [#allocation4], 1
    %s624 = scalar_lea.sflag [#allocation4], 1
    %625 = vsyncpa %s624, 1

</llo_original>
